<compile_context>
chip_gen: v6e
topology: v6e:2x2x1
jax: 0.10.0
libtpu: 0.0.40
codegen_flags: <defaults>
</compile_context>

<pallas_src>
import functools
import math

import jax
import jax.numpy as jnp
from jax import lax
from jax.experimental import pallas as pl
from jax.experimental.pallas import tpu as pltpu


# ------------------------------ tile helpers ------------------------------

def _pick_tile(n, target, align):
    """Largest divisor of n that is <= target and (a multiple of `align` or == n)."""
    t = min(n, target)
    while t > 1:
        if n % t == 0 and (t == n or t % align == 0):
            return t
        t -= 1
    return n


# --------------------------- tiled linear kernel ---------------------------

def _linear_kernel(x_ref, w_ref, o_ref, acc_ref):
    # grid = (M//tm, N//tn, K//tk); K innermost ("arbitrary"), fp32 accumulator.
    @pl.when(pl.program_id(2) == 0)
    def _():
        acc_ref[...] = jnp.zeros_like(acc_ref)

    acc_ref[...] += jnp.dot(x_ref[...], w_ref[...],
                            preferred_element_type=jnp.float32)

    @pl.when(pl.program_id(2) == pl.num_programs(2) - 1)
    def _():
        o_ref[...] = acc_ref[...].astype(o_ref.dtype)


def linear_pallas(x2d, w, *, tile_m=512, tile_n=256, tile_k=256):
    M, K = x2d.shape
    K2, N = w.shape
    assert K == K2
    tm = _pick_tile(M, tile_m, 8)
    tn = _pick_tile(N, tile_n, 128)
    tk = _pick_tile(K, tile_k, 128)
    itemsize = jnp.dtype(x2d.dtype).itemsize
    cost = pl.CostEstimate(
        flops=2 * M * N * K,
        transcendentals=0,
        bytes_accessed=(M * K + K * N + M * N) * itemsize,
    )
    return pl.pallas_call(
        _linear_kernel,
        out_shape=jax.ShapeDtypeStruct((M, N), x2d.dtype),
        grid_spec=pltpu.PrefetchScalarGridSpec(
            num_scalar_prefetch=0,
            grid=(M // tm, N // tn, K // tk),
            in_specs=[
                pl.BlockSpec((tm, tk), lambda i, j, k: (i, k)),
                pl.BlockSpec((tk, tn), lambda i, j, k: (k, j)),
            ],
            out_specs=pl.BlockSpec((tm, tn), lambda i, j, k: (i, j)),
            scratch_shapes=[pltpu.VMEM((tm, tn), jnp.float32)],
        ),
        compiler_params=pltpu.CompilerParams(
            dimension_semantics=("parallel", "parallel", "arbitrary")),
        cost_estimate=cost,
    )(x2d, w)


# ------------------------ flash-style attention kernel ----------------------

def _flash_attn_kernel(q_ref, k_ref, v_ref, o_ref, m_ref, l_ref, acc_ref,
                       *, tq, tkv, inv_scale):
    # grid = (B, H, T//tq, T//tkv); kv innermost "arbitrary" with online softmax.
    qi = pl.program_id(2)
    ki = pl.program_id(3)

    @pl.when(ki == 0)
    def _():
        m_ref[...] = jnp.full_like(m_ref, -jnp.inf)
        l_ref[...] = jnp.zeros_like(l_ref)
        acc_ref[...] = jnp.zeros_like(acc_ref)

    first_row = qi * tq
    last_row = first_row + (tq - 1)
    first_col = ki * tkv
    last_col = first_col + (tkv - 1)

    def process(apply_mask):
        # Pre-scale q: O(tq*D) multiplies instead of O(tq*tkv) divides.
        q = q_ref[...] * inv_scale                              # (tq, D)
        # NT matmul on the MXU (contract head_dim of both operands);
        # no explicit transpose / relayout of the K tile in VMEM.
        s = lax.dot_general(q, k_ref[...], (((1,), (1,)), ((), ())),
                            preferred_element_type=jnp.float32)  # (tq, tkv)
        if apply_mask:
            # Causal mask only on diagonal-straddling tiles
            # (matches torch.where(causal_mask, attn, masked_bias=-1e9)).
            row = first_row + lax.broadcasted_iota(jnp.int32, (tq, tkv), 0)
            col = first_col + lax.broadcasted_iota(jnp.int32, (tq, tkv), 1)
            s = jnp.where(col <= row, s, jnp.float32(-1e9))

        m_prev = m_ref[...]
        m_new = jnp.maximum(m_prev, jnp.max(s, axis=-1, keepdims=True))
        alpha = jnp.exp(m_prev - m_new)
        p = jnp.exp(s - m_new)
        l_ref[...] = alpha * l_ref[...] + jnp.sum(p, axis=-1, keepdims=True)
        acc_ref[...] = alpha * acc_ref[...] + lax.dot_general(
            p.astype(v_ref.dtype), v_ref[...], (((1,), (0,)), ((), ())),
            preferred_element_type=jnp.float32)
        m_ref[...] = m_new

    # kv tile entirely below the causal diagonal: unmasked fast path.
    @pl.when(last_col <= first_row)
    def _():
        process(apply_mask=False)

    # kv tile straddling the diagonal: apply the causal mask.
    @pl.when(jnp.logical_and(first_col <= last_row, last_col > first_row))
    def _():
        process(apply_mask=True)

    # kv tiles entirely above the diagonal (first_col > last_row) are skipped.

    @pl.when(ki == pl.num_programs(3) - 1)
    def _():
        o_ref[...] = (acc_ref[...] *
                      pl.reciprocal(l_ref[...], approx=True)).astype(o_ref.dtype)


def attention_pallas(q, k, v, scale, *, tile_q=256, tile_kv=256):
    # q, k, v: (B, H, T, D)
    B, H, T, D = q.shape
    tq = _pick_tile(T, tile_q, 8)
    tkv = _pick_tile(T, tile_kv, 8)
    kernel = functools.partial(_flash_attn_kernel, tq=tq, tkv=tkv,
                               inv_scale=1.0 / float(scale))
    itemsize = jnp.dtype(q.dtype).itemsize
    cost = pl.CostEstimate(
        flops=2 * B * H * T * T * D,          # 2 matmuls (causal skip ~halves this)
        transcendentals=B * H * T * T // 2,   # exp under the causal mask
        bytes_accessed=4 * B * H * T * D * itemsize,
    )
    return pl.pallas_call(
        kernel,
        out_shape=jax.ShapeDtypeStruct((B, H, T, D), v.dtype),
        grid_spec=pltpu.PrefetchScalarGridSpec(
            num_scalar_prefetch=0,
            grid=(B, H, T // tq, T // tkv),
            in_specs=[
                pl.BlockSpec((None, None, tq, D), lambda b, h, i, j: (b, h, i, 0)),
                pl.BlockSpec((None, None, tkv, D), lambda b, h, i, j: (b, h, j, 0)),
                pl.BlockSpec((None, None, tkv, D), lambda b, h, i, j: (b, h, j, 0)),
            ],
            out_specs=pl.BlockSpec((None, None, tq, D),
                                   lambda b, h, i, j: (b, h, i, 0)),
            scratch_shapes=[
                pltpu.VMEM((tq, 1), jnp.float32),   # m (running max)
                pltpu.VMEM((tq, 1), jnp.float32),   # l (running denom)
                pltpu.VMEM((tq, D), jnp.float32),   # acc (unnormalized output)
            ],
        ),
        compiler_params=pltpu.CompilerParams(
            dimension_semantics=("parallel", "parallel", "parallel", "arbitrary")),
        cost_estimate=cost,
    )(q, k, v)


# ------------------------------ rotary (glue) ------------------------------

def fixed_pos_embedding(dim, seq_len):
    inv_freq = 1.0 / (10000.0 ** (jnp.arange(0, dim, 2, dtype=jnp.float32) / dim))
    sinusoid = jnp.einsum(
        "i,j->ij", jnp.arange(seq_len, dtype=jnp.float32), inv_freq
    )
    return jnp.sin(sinusoid), jnp.cos(sinusoid)


def rotate_every_two(x):
    x1 = x[..., ::2]
    x2 = x[..., 1::2]
    return jnp.stack((-x2, x1), axis=-1).reshape(x.shape)


def apply_rotary_pos_emb(x, sincos, offset=0):
    # x: (B, T, H, rot)
    sin, cos = (
        jnp.repeat(t, 2, axis=-1)[None, offset:x.shape[1] + offset, None, :]
        for t in sincos
    )
    return x * cos + rotate_every_two(x) * sin


# --------------------------- CodeGenAttention fwd ---------------------------

def codegen_attention_forward(params, hidden_states, *, num_heads, head_dim,
                              rotary_dim):
    B, T, E = hidden_states.shape
    assert num_heads * head_dim == E, (
        "embed_dim must equal num_heads * head_dim")
    mp_num = 4

    # qkv projection (tiled Pallas matmul)
    qkv = linear_pallas(hidden_states.reshape(B * T, E), params["w_qkv"])
    qkv = qkv.reshape(B, T, 3 * E)

    qkv_split = qkv.reshape(B, T, mp_num, -1)
    local_dim = head_dim * num_heads // mp_num
    # NOTE: CodeGen split order is (query, value, key)
    query = qkv_split[..., 0 * local_dim:1 * local_dim]
    value = qkv_split[..., 1 * local_dim:2 * local_dim]
    key = qkv_split[..., 2 * local_dim:3 * local_dim]

    def split_heads(x):
        # (B, T, mp, local) -> (B, T, H, D)
        x = x.reshape(B, T, mp_num, num_heads // mp_num, head_dim)
        return x.reshape(B, T, num_heads, head_dim)

    query = split_heads(query)
    key = split_heads(key)
    value = split_heads(value).transpose(0, 2, 1, 3)   # (B, H, T, D)

    seq_len = T
    offset = 0  # TODO(synk): layer_past / use_cache KV-cache path not implemented (stateless forward)
    # TODO(synk): attention_mask / head_mask not supported (None in this forward)
    if rotary_dim is not None:
        # TODO(synk): rotary could be fused into the attention kernel (VPU/XLU
        # work under the MXU); kept in JAX as a one-off O(B*T*H*rot) pass.
        k_rot, k_pass = key[..., :rotary_dim], key[..., rotary_dim:]
        q_rot, q_pass = query[..., :rotary_dim], query[..., rotary_dim:]
        sincos = fixed_pos_embedding(rotary_dim, seq_len)
        k_rot = apply_rotary_pos_emb(k_rot, sincos, offset)
        q_rot = apply_rotary_pos_emb(q_rot, sincos, offset)
        key = jnp.concatenate([k_rot, k_pass], axis=-1)
        query = jnp.concatenate([q_rot, q_pass], axis=-1)
    else:
        sincos = fixed_pos_embedding(head_dim, seq_len)
        key = apply_rotary_pos_emb(key, sincos, offset)
        query = apply_rotary_pos_emb(query, sincos, offset)

    # (B, H, T, D) layout keeps repeatedly re-read K/V tiles contiguous in HBM.
    key = key.transpose(0, 2, 1, 3)
    query = query.transpose(0, 2, 1, 3)

    scale = math.sqrt(float(head_dim))
    attn_out = attention_pallas(query, key, value, scale)   # (B, H, T, D)

    # merge heads -> (B, T, E)
    attn_out = attn_out.transpose(0, 2, 1, 3).reshape(B, T, num_heads * head_dim)

    # output projection (tiled Pallas matmul)
    out = linear_pallas(attn_out.reshape(B * T, E), params["w_out"]).reshape(B, T, E)
    # attn_dropout / resid_dropout act as identity at inference
    return out


# ------------------------------ pure-JAX check ------------------------------

def reference_forward(params, hidden_states, *, num_heads, head_dim, rotary_dim):
    B, T, E = hidden_states.shape
    mp_num = 4
    qkv = hidden_states.reshape(B * T, E) @ params["w_qkv"]
    qkv = qkv.reshape(B, T, 3 * E)
    qkv_split = qkv.reshape(B, T, mp_num, -1)
    local_dim = head_dim * num_heads // mp_num
    query = qkv_split[..., 0 * local_dim:1 * local_dim]
    value = qkv_split[..., 1 * local_dim:2 * local_dim]
    key = qkv_split[..., 2 * local_dim:3 * local_dim]

    def split_heads(x):
        return x.reshape(B, T, mp_num, num_heads // mp_num, head_dim).reshape(
            B, T, num_heads, head_dim)

    query, key = split_heads(query), split_heads(key)
    value = split_heads(value).transpose(0, 2, 1, 3)

    k_rot, k_pass = key[..., :rotary_dim], key[..., rotary_dim:]
    q_rot, q_pass = query[..., :rotary_dim], query[..., rotary_dim:]
    sincos = fixed_pos_embedding(rotary_dim, T)
    key = jnp.concatenate([apply_rotary_pos_emb(k_rot, sincos), k_pass], axis=-1)
    query = jnp.concatenate([apply_rotary_pos_emb(q_rot, sincos), q_pass], axis=-1)
    key = key.transpose(0, 2, 1, 3)
    query = query.transpose(0, 2, 1, 3)

    scale = jnp.sqrt(jnp.float32(head_dim))
    s = jnp.einsum("bhqd,bhkd->bhqk", query, key) / scale
    causal = jnp.tril(jnp.ones((T, T), dtype=bool))[None, None]
    s = jnp.where(causal, s, jnp.float32(-1e9))
    p = jax.nn.softmax(s, axis=-1)
    o = jnp.einsum("bhqk,bhkd->bhqd", p, value)
    o = o.transpose(0, 2, 1, 3).reshape(B, T, E)
    return (o.reshape(B * T, E) @ params["w_out"]).reshape(B, T, E)


# ---------------------------------- main ----------------------------------

if __name__ == "__main__":
    # config: hidden_size=32, num_attention_heads=4, rotary_dim=4,
    #         max_position_embeddings>=seq, dropouts identity (inference)
    B, T, E = 2, 8, 32
    num_heads, head_dim, rotary_dim = 4, 8, 4

    key0 = jax.random.PRNGKey(0)
    k1, k2, k3 = jax.random.split(key0, 3)
    params = {
        # stored as (in, out) so kernels compute x @ W directly
        "w_qkv": 0.02 * jax.random.normal(k1, (E, 3 * E), dtype=jnp.float32),
        "w_out": 0.02 * jax.random.normal(k2, (E, E), dtype=jnp.float32),
    }
    hidden_states = jax.random.normal(k3, (B, T, E), dtype=jnp.float32)

    out = codegen_attention_forward(
        params, hidden_states,
        num_heads=num_heads, head_dim=head_dim, rotary_dim=rotary_dim)
    out = jax.block_until_ready(out)

    ref = reference_forward(
        params, hidden_states,
        num_heads=num_heads, head_dim=head_dim, rotary_dim=rotary_dim)
    ref = jax.block_until_ready(ref)

    assert out.shape == (B, T, E)
    assert jnp.allclose(out, ref, atol=1e-4, rtol=1e-4), "mismatch vs reference"
    print("KERNEL_OK")
</pallas_src>

<mosaic_0001>
module attributes {stable_mosaic.version = 11 : i64} {
  func.func @_linear_kernel(%arg0: i32, %arg1: i32, %arg2: i32, %arg3: memref<16x32xf32, #tpu.memory_space<vmem>>, %arg4: memref<32x96xf32, #tpu.memory_space<vmem>>, %arg5: memref<16x96xf32, #tpu.memory_space<vmem>>, %arg6: memref<16x96xf32, #tpu.memory_space<vmem>>) attributes {dimension_semantics = [#tpu.dimension_semantics<parallel>, #tpu.dimension_semantics<parallel>, #tpu.dimension_semantics<arbitrary>], iteration_bounds = array<i64: 1, 1, 1>, scalar_prefetch = 0 : i64, scratch_operands = 1 : i64, tpu.core_type = #tpu.core_type<tc>, window_params = [{transform_indices = @transform_0, window_bounds = array<i64: 16, 32>}, {transform_indices = @transform_1, window_bounds = array<i64: 32, 96>}, {transform_indices = @transform_2, window_bounds = array<i64: 16, 96>}]} {
    %c0_i32 = arith.constant 0 : i32
    %0 = arith.cmpi eq, %arg2, %c0_i32 : i32
    %1 = arith.extui %0 : i1 to i32
    %c0_i32_0 = arith.constant 0 : i32
    %2 = arith.cmpi ne, %1, %c0_i32_0 : i32
    scf.if %2 {
      %cst_10 = arith.constant 0.000000e+00 : f32
      %12 = vector.broadcast %cst_10 : f32 to vector<16x96xf32>
      %c0_11 = arith.constant 0 : index
      %c0_12 = arith.constant 0 : index
      %13 = vector.load %arg6[%c0_11, %c0_12] : memref<16x96xf32, #tpu.memory_space<vmem>>, vector<16x96xf32>
      tpu.vector_store %arg6[%c0_11, %c0_12], %12 {strides = array<i32>} : memref<16x96xf32, #tpu.memory_space<vmem>>, vector<16x96xf32>,
    } else {
    }
    %c0 = arith.constant 0 : index
    %c0_1 = arith.constant 0 : index
    %3 = vector.load %arg6[%c0, %c0_1] : memref<16x96xf32, #tpu.memory_space<vmem>>, vector<16x96xf32>
    %c0_2 = arith.constant 0 : index
    %c0_3 = arith.constant 0 : index
    %4 = vector.load %arg3[%c0_2, %c0_3] : memref<16x32xf32, #tpu.memory_space<vmem>>, vector<16x32xf32>
    %c0_4 = arith.constant 0 : index
    %c0_5 = arith.constant 0 : index
    %5 = vector.load %arg4[%c0_4, %c0_5] : memref<32x96xf32, #tpu.memory_space<vmem>>, vector<32x96xf32>
    %cst = arith.constant dense<0.000000e+00> : vector<16x96xf32>
    %6 = tpu.matmul %4, %5, %cst {dimension_numbers = #tpu.dot_dimension_numbers<[1], [0], [0], [1], [0, 0, 1, 1], [], []>} : vector<16x32xf32>, vector<32x96xf32>, vector<16x96xf32> -> vector<16x96xf32>
    %7 = arith.addf %3, %6 : vector<16x96xf32>
    %c0_6 = arith.constant 0 : index
    %c0_7 = arith.constant 0 : index
    %8 = vector.load %arg6[%c0_6, %c0_7] : memref<16x96xf32, #tpu.memory_space<vmem>>, vector<16x96xf32>
    tpu.vector_store %arg6[%c0_6, %c0_7], %7 {strides = array<i32>} : memref<16x96xf32, #tpu.memory_space<vmem>>, vector<16x96xf32>,
    %c0_i32_8 = arith.constant 0 : i32
    %9 = arith.cmpi eq, %arg2, %c0_i32_8 : i32
    %10 = arith.extui %9 : i1 to i32
    %c0_i32_9 = arith.constant 0 : i32
    %11 = arith.cmpi ne, %10, %c0_i32_9 : i32
    scf.if %11 {
      %c0_10 = arith.constant 0 : index
      %c0_11 = arith.constant 0 : index
      %12 = vector.load %arg6[%c0_10, %c0_11] : memref<16x96xf32, #tpu.memory_space<vmem>>, vector<16x96xf32>
      %c0_12 = arith.constant 0 : index
      %c0_13 = arith.constant 0 : index
      %13 = vector.load %arg5[%c0_12, %c0_13] : memref<16x96xf32, #tpu.memory_space<vmem>>, vector<16x96xf32>
      tpu.vector_store %arg5[%c0_12, %c0_13], %12 {strides = array<i32>} : memref<16x96xf32, #tpu.memory_space<vmem>>, vector<16x96xf32>,
    } else {
    }
    return
  }
  func.func @transform_0(%arg0: i32, %arg1: i32, %arg2: i32) -> (i32, i32) {
    %c0_i32 = arith.constant 0 : i32
    return %arg0, %arg2 : i32, i32
  }
  func.func @transform_1(%arg0: i32, %arg1: i32, %arg2: i32) -> (i32, i32) {
    %c0_i32 = arith.constant 0 : i32
    return %arg2, %arg1 : i32, i32
  }
  func.func @transform_2(%arg0: i32, %arg1: i32, %arg2: i32) -> (i32, i32) {
    %c0_i32 = arith.constant 0 : i32
    return %arg0, %arg1 : i32, i32
  }
}

</mosaic_0001>

<llo_original>
// kernel: tpu_custom_call.1
$region0: #{tpu_custom_call.1}
  #allocation0 [shape = 'u32[]', space=smem, size = 0x4, offset = 0x4, fixed_abs, tag = 'smem constant byte address 0x4 - core index']
  #allocation1 [shape = 'u32[144,128]{1,0:T(1,128)}', space=vmem, size = 0x12000, scoped, tag = 'internal scratch']
  #allocation2 [shape = 'f32[16,96]{1,0:T(8,128)}', space=vmem, size = 0x2000, scoped, tag = 'scratch operand']
  %s0 = inlined_call_operand.hbm [shape: f32[16,32], index: 0, kind: input, shape index: {}]
  %s1 = inlined_call_operand.hbm [shape: f32[32,96], index: 1, kind: input, shape index: {}]
  %s2 = inlined_call_operand.hbm [shape: f32[16,96], index: 2, kind: output, shape index: {}]
  %s3 = sld [smem:[#allocation0]]
  $region34: #{tpu_custom_call.1} parent=0
    _
  %s5 = ssub.s32 1, %s3
  %s6 = scalar_select 0, %s5, %s3
  $region1: #{tpu_custom_call.1} parent=0
    #allocation3 [shape = 'u8[8192]{0}', space=vmem, size = 0x2000, scoped, tag = 'input window, operand 0, single buffered']
    #allocation4 [shape = 's32[1]{0}', space=sflag, size = 0x4, scoped, tag = 'scoped memory for tpu_custom_call.1']
    #allocation5 [shape = 's32[1]{0}', space=sflag, size = 0x4, scoped, tag = 'scoped memory for tpu_custom_call.1']
    #allocation6 [shape = 'u8[16384]{0}', space=vmem, size = 0x4000, scoped, tag = 'input window, operand 1, single buffered']
    #allocation7 [shape = 's32[1]{0}', space=sflag, size = 0x4, scoped, tag = 'scoped memory for tpu_custom_call.1']
    #allocation8 [shape = 'u8[8192]{0}', space=vmem, size = 0x2000, scoped, tag = 'output window, operand 0, single buffered']
    %7 = vsyncpa [#allocation4], 0
    %8 = vsyncpa [#allocation7], 0
    %9 = vsyncpa [#allocation5], 0
    // Predicated region
    $region2: #{tpu_custom_call.1} parent=1 // pred_check
      _
    $region3: #{tpu_custom_call.1} parent=1 // pred_check_branch
      %11 = sbr.rel (0) target = $region5
    $region4: #{tpu_custom_call.1} parent=1 // pred_region
      %s13 = ssub.s32 256, 256
      %14 = vsyncadd [#allocation4], %s13
      %s15 = sshll.u32 [#allocation3], 4
      %s16 = int_to_ptr.vmem [resolvable:$true] %s15
      %21 = dma.hbm_to_vmem [thread:$0]  %s0, 256, %s16, [#allocation4], 128, 128, 8
    $region5: #{tpu_custom_call.1} parent=1 // pred_fallthru
      _
    // Predicated region
    $region6: #{tpu_custom_call.1} parent=1 // pred_check
      _
    $region7: #{tpu_custom_call.1} parent=1 // pred_check_branch
      %23 = sbr.rel (0) target = $region9
    $region8: #{tpu_custom_call.1} parent=1 // pred_region
      %s25 = ssub.s32 512, 512
      %26 = vsyncadd [#allocation7], %s25
      %s27 = sshll.u32 [#allocation6], 4
      %s28 = int_to_ptr.vmem [resolvable:$true] %s27
      %33 = dma.hbm_to_vmem [thread:$0]  %s1, 512, %s28, [#allocation7], 128, 128, 8
    $region9: #{tpu_custom_call.1} parent=1 // pred_fallthru
      _
    // Predicated region
    $region10: #{tpu_custom_call.1} parent=1 // pred_check
      _
    $region11: #{tpu_custom_call.1} parent=1 // pred_check_branch
      %35 = sbr.rel (0) target = $region13
    $region12: #{tpu_custom_call.1} parent=1 // pred_region
      %36 = dma.done [#allocation4], 256
    $region13: #{tpu_custom_call.1} parent=1 // pred_fallthru
      _
    // Predicated region
    $region14: #{tpu_custom_call.1} parent=1 // pred_check
      _
    $region15: #{tpu_custom_call.1} parent=1 // pred_check_branch
      %38 = sbr.rel (0) target = $region17
    $region16: #{tpu_custom_call.1} parent=1 // pred_region
      %39 = dma.done [#allocation7], 512
    $region17: #{tpu_custom_call.1} parent=1 // pred_fallthru
      _
    %p40 = scmp.eq.s32.totalorder 0, 0
    // Predicated region
    $region18: #{tpu_custom_call.1} parent=1 // pred_check
      %p41 = pneg %p40
    $region19: #{tpu_custom_call.1} parent=1 // pred_check_branch
      %43 = sbr.rel (%p41) target = $region21
    $region20: #{tpu_custom_call.1} parent=1 // pred_region
      %vm44 = vcmask 785408
      %45 = vst.msk [vmem:[#allocation2] sm:$0xff] %vm44, 0.0
      %46 = vst.msk [vmem:[#allocation2 + $0x8] sm:$0xff] %vm44, 0.0
    $region21: #{tpu_custom_call.1} parent=1 // pred_fallthru
      _
    %v47 = vld [vmem:[#allocation2] sm:$0xff]
    %v48 = vld [vmem:[#allocation2 + $0x8] sm:$0xff]
    %v49 = vld [vmem:[#allocation3] sm:$0xff]
    %v50 = vld [vmem:[#allocation3 + $0x8] sm:$0xff]
    %v51 = vld [vmem:[#allocation6] sm:$0xff]
    %v52 = vld [vmem:[#allocation6 + $0x8] sm:$0xff]
    %v53 = vld [vmem:[#allocation6 + $0x10] sm:$0xff]
    %v54 = vld [vmem:[#allocation6 + $0x18] sm:$0xff]
    %vm55 = vcmask 261120
    %v57 = vsel %vm55, %v49, 0
    %v60 = vsel %vm55, %v50, 0
    %62 = vmatprep.subr.mxu0 0.0
    %63 = vmatpush1.msra.mxu0 0.0
    %64 = vmatprep.subr.mxu0 0.0
    %65 = vmatpush1.msra.mxu0 0.0
    %66 = vmatprep.subr.mxu0 0.0
    %67 = vmatpush1.msra.mxu0 0.0
    %68 = vmatprep.subr.mxu0 0.0
    %69 = vmatpush1.msra.mxu0 0.0
    %70 = vmatprep.subr.mxu0 0.0
    %71 = vmatpush1.msra.mxu0 0.0
    %72 = vmatprep.subr.mxu0 0.0
    %73 = vmatpush1.msra.mxu0 0.0
    %74 = vmatprep.subr.mxu0 0.0
    %75 = vmatpush1.msra.mxu0 0.0
    %76 = vmatprep.subr.mxu0 0.0
    %77 = vmatpush1.msra.mxu0 0.0
    %78 = vmatprep.subr.mxu0 0.0
    %79 = vmatpush1.msra.mxu0 0.0
    %80 = vmatprep.subr.mxu0 0.0
    %81 = vmatpush1.msra.mxu0 0.0
    %82 = vmatprep.subr.mxu0 0.0
    %83 = vmatpush1.msra.mxu0 0.0
    %84 = vmatprep.subr.mxu0 0.0
    %85 = vmatpush1.msra.mxu0 0.0
    %86 = vmatprep.subr.mxu0 0.0
    %87 = vmatpush1.msra.mxu0 %v54
    %88 = vmatprep.subr.mxu0 0.0
    %89 = vmatpush1.msra.mxu0 %v53
    %90 = vmatprep.subr.mxu0 0.0
    %91 = vmatpush1.msra.mxu0 %v52
    %92 = vmatprep.subr.mxu0 0.0
    %93 = vmatpush1.msra.mxu0 %v51
    %94 = vmatprep.subr.mxu0 0.0
    %95 = vmatpush2.msra.mxu0 0.0
    %96 = vmatprep.subr.mxu0 0.0
    %97 = vmatpush2.msra.mxu0 0.0
    %98 = vmatprep.subr.mxu0 0.0
    %99 = vmatpush2.msra.mxu0 0.0
    %100 = vmatprep.subr.mxu0 0.0
    %101 = vmatpush2.msra.mxu0 0.0
    %102 = vmatprep.subr.mxu0 0.0
    %103 = vmatpush2.msra.mxu0 0.0
    %104 = vmatprep.subr.mxu0 0.0
    %105 = vmatpush2.msra.mxu0 0.0
    %106 = vmatprep.subr.mxu0 0.0
    %107 = vmatpush2.msra.mxu0 0.0
    %108 = vmatprep.subr.mxu0 0.0
    %109 = vmatpush2.msra.mxu0 0.0
    %110 = vmatprep.subr.mxu0 0.0
    %111 = vmatpush2.msra.mxu0 0.0
    %112 = vmatprep.subr.mxu0 0.0
    %113 = vmatpush2.msra.mxu0 0.0
    %114 = vmatprep.subr.mxu0 0.0
    %115 = vmatpush2.msra.mxu0 0.0
    %116 = vmatprep.subr.mxu0 0.0
    %117 = vmatpush2.msra.mxu0 0.0
    %118 = vmatprep.subr.mxu0 0.0
    %119 = vmatpush2.msra.mxu0 0.0
    %120 = vmatprep.subr.mxu0 0.0
    %121 = vmatpush2.msra.mxu0 0.0
    %122 = vmatprep.subr.mxu0 0.0
    %123 = vmatpush2.msra.mxu0 0.0
    %124 = vmatprep.subr.mxu0 0.0
    %125 = vmatpush2.msra.mxu0 0.0
    %126 = vmatprep.mubr.f32.mxu0 0.0
    %127 = vmatmul.mubr.f32.gmra.mxu0 %v57
    %v128 = vpop.f32.mrf.mxu0
    %v129 = vadd.f32 0.0, %v128
    %v130 = vpop.f32.mrf.mxu0
    %131 = vmatprep.mubr.f32.mxu0 0.0
    %132 = vmatmul.mubr.f32.gmra.mxu0 %v60
    %v133 = vpop.f32.mrf.mxu0
    %v134 = vadd.f32 0.0, %v133
    %v135 = vpop.f32.mrf.mxu0
    %136 = vdwg.mxu0
    %v137 = vadd.f32 %v47, %v129
    %v138 = vadd.f32 %v48, %v134
    %vm139 = vcmask 785408
    %140 = vst.msk [vmem:[#allocation2] sm:$0xff] %vm139, %v137
    %141 = vst.msk [vmem:[#allocation2 + $0x8] sm:$0xff] %vm139, %v138
    // Predicated region
    $region22: #{tpu_custom_call.1} parent=1 // pred_check
      %p142 = pneg %p40
    $region23: #{tpu_custom_call.1} parent=1 // pred_check_branch
      %144 = sbr.rel (%p142) target = $region25
    $region24: #{tpu_custom_call.1} parent=1 // pred_region
      %v145 = vld [vmem:[#allocation2] sm:$0xff]
      %v146 = vld [vmem:[#allocation2 + $0x8] sm:$0xff]
      %147 = vst.msk [vmem:[#allocation8] sm:$0xff] %vm139, %v145
      %148 = vst.msk [vmem:[#allocation8 + $0x8] sm:$0xff] %vm139, %v146
    $region25: #{tpu_custom_call.1} parent=1 // pred_fallthru
      _
    // Predicated region
    $region26: #{tpu_custom_call.1} parent=1 // pred_check
      _
    $region27: #{tpu_custom_call.1} parent=1 // pred_check_branch
      %150 = sbr.rel (0) target = $region29
    $region28: #{tpu_custom_call.1} parent=1 // pred_region
      %s152 = ssub.s32 256, 256
      %153 = vsyncadd [#allocation5], %s152
      %s154 = sshll.u32 [#allocation8], 4
      %s155 = int_to_ptr.vmem [resolvable:$true] %s154
      %160 = dma.vmem_to_hbm [thread:$0]  %s155, 256, %s2, [#allocation5], 128, 128, 8
    $region29: #{tpu_custom_call.1} parent=1 // pred_fallthru
      _
    // Predicated region
    $region30: #{tpu_custom_call.1} parent=1 // pred_check
      _
    $region31: #{tpu_custom_call.1} parent=1 // pred_check_branch
      %162 = sbr.rel (0) target = $region33
    $region32: #{tpu_custom_call.1} parent=1 // pred_region
      %163 = dma.done [#allocation5], 256
    $region33: #{tpu_custom_call.1} parent=1 // pred_fallthru
      _
    %164 = vsyncpa [#allocation4], 1
    %165 = vsyncpa [#allocation7], 1
    %166 = vsyncpa [#allocation5], 1

</llo_original>
